<compile_context>
chip_gen: v6e
topology: v6e:2x2x1
jax: 0.10.0
libtpu: 0.0.40
codegen_flags: <defaults>
</compile_context>

<pallas_src>
import functools

import jax
import jax.numpy as jnp
from jax.experimental import pallas as pl
from jax.experimental.pallas import tpu as pltpu


# Row tile (sublane axis) and target pixels per grid step.  2048 rows x 128
# lanes = 256K pixels/step: bf16 in-block ~2 MiB, out-block ~1.5 MiB, scratch
# ~1.5 MiB; double-buffered total < 10 MiB — well inside the 32 MiB scoped
# VMEM limit and v7x's 64 MiB physical VMEM, and big enough that DMA per step
# dwarfs the ~0.35 us fixed step overhead on all of v5e/v6e/v7x.
_MAX_TILE_ROWS = 2048
_TARGET_STEP_PIXELS = 256 * 1024
_LANES = 128


def _tta_head_softmax_kernel(w_ref, b_ref, x_ref, o_ref, p_scr):
    """Fused 1x1-conv head + bias + per-pixel softmax + num_tta replication.

    Grid: (batch tiles, row tiles, num_tta).  Probabilities are computed once
    per (batch, row) tile (t == 0) into VMEM scratch and replicated to the
    num_tta output slabs: a pointwise head + per-pixel softmax is exactly
    equivariant to flips/rot90, so reverse_tta(apply_tta(.)) cancels and every
    TTA branch equals the identity branch.

    w_ref: (K, C)              SMEM f32 -- torch Conv2d(C, K, 1) weight squeezed
    b_ref: (K,)                SMEM f32
    x_ref: (TN, C, ROWS, 128)  VMEM io dtype (sublane/lane-dense pixel tile)
    o_ref: (TN, K, ROWS, 128)  VMEM io dtype
    p_scr: (TN, K, ROWS, 128)  VMEM io dtype scratch, resident across the t axis
    """
    t = pl.program_id(2)

    @pl.when(t == 0)
    def _compute_probs():
        C = x_ref.shape[1]
        K = o_ref.shape[1]
        x = x_ref[...].astype(jnp.float32)           # (TN, C, ROWS, 128) f32 math

        # 1x1-conv head: K*C scalar-broadcast FMAs on full (TN, ROWS, 128) vreg
        # tiles (VPU).  This is only right because C=4, K=3: a (TM,4)x(4,3) MXU
        # dot would be <0.1% utilized.  If this head ever becomes a real
        # backbone output with C >= 128, switch to jnp.dot with pixels on the M
        # axis (block (TILE_M, C) x (C, K), preferred_element_type=f32) so the
        # contraction runs on the MXU.
        logits = []
        for k in range(K):
            acc = x[:, 0] * w_ref[k, 0]
            for c in range(1, C):
                acc = acc + x[:, c] * w_ref[k, c]
            logits.append(acc + b_ref[k])

        if K == 1:
            # logits_to_probabilities: sigmoid branch.
            p_scr[:, 0] = (1.0 / (1.0 + jnp.exp(-logits[0]))).astype(p_scr.dtype)
        else:
            # Softmax over the K class planes: elementwise VALU/EUP only
            # (no cross-lane XLU reduce).
            m = logits[0]
            for k in range(1, K):
                m = jnp.maximum(m, logits[k])
            exps = [jnp.exp(l - m) for l in logits]   # EUP
            s = exps[0]
            for k in range(1, K):
                s = s + exps[k]
            inv = pl.reciprocal(s, approx=True)       # EUP (free slot)
            inv = inv * (2.0 - s * inv)               # one Newton step -> ~f32 accuracy
            for k in range(K):
                p_scr[:, k] = (exps[k] * inv).astype(p_scr.dtype)

    # Replicate the resident probability tile to TTA branch t.  Dense unmasked
    # (ROWS, 128) stores; this write is the kernel's dominant HBM traffic.
    o_ref[...] = p_scr[...]


def _tta_probs_pallas(x3, w, b, *, num_tta, io_dtype):
    """x3: (N, C, HW) io_dtype, w: (K, C) f32, b: (K,) f32.

    Returns (num_tta, N, K, HW) io_dtype probabilities; all num_tta slabs are
    identical (pointwise head => every TTA branch equals the identity branch).
    """
    N, C, HW = x3.shape
    K = w.shape[0]

    rows = pl.cdiv(HW, _LANES)
    hw_pad = rows * _LANES
    if hw_pad != HW:
        # TODO(synk): only hit when H*W is not a multiple of 128; typical
        # segmentation patch sizes (>=128x128) never take this pad path.
        x3 = jnp.pad(x3, ((0, 0), (0, 0), (0, hw_pad - HW)))
    x4 = x3.reshape(N, C, rows, _LANES)               # free reshape, no transpose

    # Sublane tile: whole image if it fits, else a multiple-of-8 chunk.  The
    # boundary block may be partial -- Pallas masks its writeback (no pad/slice
    # round trips in XLA).
    tile_rows = rows if rows <= _MAX_TILE_ROWS else _MAX_TILE_ROWS
    n_row_tiles = pl.cdiv(rows, tile_rows)

    # Batch several small images per grid step so each step still moves a few
    # MB (amortizes the ~0.35 us fixed per-step cost for tiny patches).
    tile_n = max(1, min(N, _TARGET_STEP_PIXELS // (tile_rows * _LANES)))
    while N % tile_n:
        tile_n -= 1
    # v7x megacore: keep >= 2 "parallel" grid steps when there is more than one
    # image, so the grid shards across both TensorCores.
    if tile_n == N and N > 1 and n_row_tiles == 1:
        tile_n = max(1, N // 2)
        while N % tile_n:
            tile_n -= 1

    grid = (N // tile_n, n_row_tiles, num_tta)

    itemsize = jnp.finfo(io_dtype).bits // 8
    n_pix = N * hw_pad
    cost = pl.CostEstimate(
        flops=n_pix * (2 * K * C + 5 * K),
        transcendentals=n_pix * (K + 1),
        bytes_accessed=n_pix * (C + num_tta * K) * itemsize,
    )

    out = pl.pallas_call(
        _tta_head_softmax_kernel,
        out_shape=jax.ShapeDtypeStruct((num_tta, N, K, rows, _LANES), io_dtype),
        grid_spec=pltpu.PrefetchScalarGridSpec(
            num_scalar_prefetch=0,
            grid=grid,
            in_specs=[
                pl.BlockSpec(memory_space=pltpu.MemorySpace.SMEM),   # w (K, C)
                pl.BlockSpec(memory_space=pltpu.MemorySpace.SMEM),   # b (K,)
                # Input tile: independent of t -> stays resident across the
                # innermost TTA axis (fetched once per (n, p) tile).
                pl.BlockSpec((tile_n, C, tile_rows, _LANES),
                             lambda n, p, t: (n, 0, p, 0)),
            ],
            out_specs=pl.BlockSpec((None, tile_n, K, tile_rows, _LANES),
                                   lambda n, p, t: (t, n, 0, p, 0)),
            scratch_shapes=[pltpu.VMEM((tile_n, K, tile_rows, _LANES), io_dtype)],
        ),
        compiler_params=pltpu.CompilerParams(
            dimension_semantics=("parallel", "parallel", "arbitrary"),
            vmem_limit_bytes=32 * 1024 * 1024,
        ),
        cost_estimate=cost,
    )(w, b, x4)

    out = out.reshape(num_tta, N, K, hw_pad)
    if hw_pad != HW:
        out = out[..., :HW]
    return out


# (apply_tta, reverse_tta) pairs matching TTAModel.apply_tta / reverse_tta.
_TTA_FWD_REV = (
    (lambda a: a, lambda a: a),                                                   # identity
    (lambda a: jnp.flip(a, axis=-1), lambda a: jnp.flip(a, axis=-1)),             # TF.hflip
    (lambda a: jnp.flip(a, axis=-2), lambda a: jnp.flip(a, axis=-2)),             # TF.vflip
    (lambda a: jnp.rot90(a, 1, (-2, -1)), lambda a: jnp.rot90(a, -1, (-2, -1))),  # rotate(+90)
    (lambda a: jnp.rot90(a, 2, (-2, -1)), lambda a: jnp.rot90(a, -2, (-2, -1))),  # rotate(+180)
    (lambda a: jnp.rot90(a, 3, (-2, -1)), lambda a: jnp.rot90(a, -3, (-2, -1))),  # rotate(+270)
)


@functools.partial(jax.jit, static_argnames=("pointwise_head", "io_dtype"))
def tta_model_forward(patches, weight, bias, *, pointwise_head=True,
                      io_dtype=jnp.bfloat16):
    """Equivalent of TTAModel.forward for a 1x1-conv segmentation head.

    patches: (N, C, H, W) float (PyTorch NCHW)
    weight:  (K, C)  (torch Conv2d(C, K, 1) weight squeezed)
    bias:    (K,)
    returns: (6, N, K, H, W) io_dtype probabilities

    io_dtype=bf16 halves HBM traffic (input read + dominant 6x output write);
    math stays f32 in-kernel, so per-pixel probabilities sum to 1 within ~1e-3
    (use io_dtype=jnp.float32 for ~1e-6).  In a real pipeline patches would
    already arrive in bf16; here the cast is done in the wrapper.

    pointwise_head=True exploits that a pointwise head + per-pixel softmax is
    exactly equivariant to flips/rot90, so reverse_tta cancels apply_tta and
    all 6 TTA branches equal the identity branch (the 6x replication is fused
    into the kernel).  pointwise_head=False runs the general 6-branch geometric
    TTA path (required for real, non-pointwise backbones).
    """
    N, C, H, W = patches.shape
    assert H == W, "90-degree TTA rotations assume square patches"
    K = weight.shape[0]

    w = weight.astype(jnp.float32)
    b = bias.astype(jnp.float32)
    x = patches.astype(io_dtype)

    if pointwise_head:
        probs6 = _tta_probs_pallas(x.reshape(N, C, H * W), w, b,
                                   num_tta=6, io_dtype=io_dtype)
        return probs6.reshape(6, N, K, H, W)

    # General geometric path (non-pointwise backbones).
    # TODO(synk): hflip/vflip/rot180 could be folded into the BlockSpec
    # index_map + in-kernel XLU reversal to avoid the extra HBM round trips;
    # only worth doing once the head is a real (non-pointwise) backbone.
    outs = []
    for fwd, rev in _TTA_FWD_REV:
        xi = fwd(x)                                                   # apply_tta
        pi = _tta_probs_pallas(xi.reshape(N, C, H * W), w, b,
                               num_tta=1, io_dtype=io_dtype)          # model + softmax
        outs.append(rev(pi.reshape(N, K, H, W)))                      # reverse_tta
    return jnp.stack(outs, axis=0)


def _reference_forward(patches, weight, bias):
    """Pure-JAX f32 reference: 1x1 conv + bias + channel softmax (identity branch)."""
    logits = jnp.einsum("kc,nchw->nkhw", weight, patches) + bias[None, :, None, None]
    m = jnp.max(logits, axis=1, keepdims=True)
    e = jnp.exp(logits - m)
    return e / jnp.sum(e, axis=1, keepdims=True)


if __name__ == "__main__":
    # Small shapes consistent with the forward: batch=2, in-channels=4,
    # spatial=16x16, nr_classes=3 (softmax branch of logits_to_probabilities).
    N, C, H, W, K = 2, 4, 16, 16, 3

    key = jax.random.PRNGKey(0)
    kx, kw, kb = jax.random.split(key, 3)
    patches = jax.random.normal(kx, (N, C, H, W), dtype=jnp.float32)
    weight = jax.random.normal(kw, (K, C), dtype=jnp.float32) * 0.1
    bias = jax.random.normal(kb, (K,), dtype=jnp.float32) * 0.01

    ref = _reference_forward(patches, weight, bias)

    # Default fast path: bf16 I/O, fused 6x TTA replication.
    out = jax.block_until_ready(tta_model_forward(patches, weight, bias))
    assert out.shape == (6, N, K, H, W), out.shape
    assert out.dtype == jnp.bfloat16, out.dtype
    outf = out.astype(jnp.float32)

    # Probabilities sum to 1 over the class dim (bf16 output => ~1e-3 accuracy).
    sums = jnp.sum(outf, axis=2)
    assert jnp.allclose(sums, jnp.ones_like(sums), atol=2e-2)
    # Matches the pure-JAX reference on the identity branch (bf16 tolerance).
    assert jnp.allclose(outf[0], ref, atol=2e-2)

    # f32 I/O path: tight tolerance check of the kernel math itself.
    out_f32 = jax.block_until_ready(
        tta_model_forward(patches, weight, bias, io_dtype=jnp.float32))
    assert out_f32.dtype == jnp.float32
    assert jnp.allclose(out_f32[0], ref, atol=1e-4, rtol=1e-4)
    sums_f32 = jnp.sum(out_f32, axis=2)
    assert jnp.allclose(sums_f32, jnp.ones_like(sums_f32), atol=1e-4)

    # General 6-branch TTA path (explicit apply/reverse geometry) agrees with
    # the pointwise-equivariance fast path, validating branches 1-5 too.
    out_general = jax.block_until_ready(
        tta_model_forward(patches, weight, bias, pointwise_head=False))
    assert out_general.shape == out.shape
    assert jnp.allclose(out_general.astype(jnp.float32), outf, atol=2e-2)
    assert jnp.allclose(out_general[3].astype(jnp.float32), ref, atol=2e-2)

    print("KERNEL_OK")
</pallas_src>

<mosaic_0001>
module attributes {stable_mosaic.version = 11 : i64} {
  func.func @_tta_head_softmax_kernel(%arg0: i32, %arg1: i32, %arg2: i32, %arg3: memref<3x4xf32, #tpu.memory_space<smem>>, %arg4: memref<3xf32, #tpu.memory_space<smem>>, %arg5: memref<1x4x2x128xbf16, #tpu.memory_space<vmem>>, %arg6: memref<1x1x3x2x128xbf16, #tpu.memory_space<vmem>>, %arg7: memref<1x3x2x128xbf16, #tpu.memory_space<vmem>>) attributes {dimension_semantics = [#tpu.dimension_semantics<parallel>, #tpu.dimension_semantics<parallel>, #tpu.dimension_semantics<arbitrary>], iteration_bounds = array<i64: 2, 1, 6>, scalar_prefetch = 0 : i64, scratch_operands = 1 : i64, tpu.core_type = #tpu.core_type<tc>, window_params = [{transform_indices = @transform_0, window_bounds = array<i64: 3, 4>}, {transform_indices = @transform_1, window_bounds = array<i64: 3>}, {transform_indices = @transform_2, window_bounds = array<i64: 1, 4, 2, 128>}, {transform_indices = @transform_3, window_bounds = array<i64: 1, 1, 3, 2, 128>}]} {
    %c0_i32 = arith.constant 0 : i32
    %0 = arith.cmpi eq, %arg2, %c0_i32 : i32
    %1 = arith.extui %0 : i1 to i32
    %c0_i32_0 = arith.constant 0 : i32
    %2 = arith.cmpi ne, %1, %c0_i32_0 : i32
    scf.if %2 {
      %c0_9 = arith.constant 0 : index
      %c0_10 = arith.constant 0 : index
      %c0_11 = arith.constant 0 : index
      %c0_12 = arith.constant 0 : index
      %7 = vector.load %arg5[%c0_9, %c0_10, %c0_11, %c0_12] : memref<1x4x2x128xbf16, #tpu.memory_space<vmem>>, vector<1x4x2x128xbf16>
      %8 = arith.extf %7 : vector<1x4x2x128xbf16> to vector<1x4x2x128xf32>
      %9 = vector.extract_strided_slice %8 {offsets = [0, 0, 0, 0], sizes = [1, 1, 2, 128], strides = [1, 1, 1, 1]} : vector<1x4x2x128xf32> to vector<1x1x2x128xf32>
      %10 = vector.shape_cast %9 : vector<1x1x2x128xf32> to vector<1x2x128xf32>
      %c0_13 = arith.constant 0 : index
      %c0_14 = arith.constant 0 : index
      %11 = memref.load %arg3[%c0_13, %c0_14] : memref<3x4xf32, #tpu.memory_space<smem>>
      %12 = vector.broadcast %11 : f32 to vector<1x2x128xf32>
      %13 = arith.mulf %10, %12 : vector<1x2x128xf32>
      %14 = vector.extract_strided_slice %8 {offsets = [0, 1, 0, 0], sizes = [1, 1, 2, 128], strides = [1, 1, 1, 1]} : vector<1x4x2x128xf32> to vector<1x1x2x128xf32>
      %15 = vector.shape_cast %14 : vector<1x1x2x128xf32> to vector<1x2x128xf32>
      %c0_15 = arith.constant 0 : index
      %c1 = arith.constant 1 : index
      %16 = memref.load %arg3[%c0_15, %c1] : memref<3x4xf32, #tpu.memory_space<smem>>
      %17 = vector.broadcast %16 : f32 to vector<1x2x128xf32>
      %18 = arith.mulf %15, %17 : vector<1x2x128xf32>
      %19 = arith.addf %13, %18 : vector<1x2x128xf32>
      %20 = vector.extract_strided_slice %8 {offsets = [0, 2, 0, 0], sizes = [1, 1, 2, 128], strides = [1, 1, 1, 1]} : vector<1x4x2x128xf32> to vector<1x1x2x128xf32>
      %21 = vector.shape_cast %20 : vector<1x1x2x128xf32> to vector<1x2x128xf32>
      %c0_16 = arith.constant 0 : index
      %c2 = arith.constant 2 : index
      %22 = memref.load %arg3[%c0_16, %c2] : memref<3x4xf32, #tpu.memory_space<smem>>
      %23 = vector.broadcast %22 : f32 to vector<1x2x128xf32>
      %24 = arith.mulf %21, %23 : vector<1x2x128xf32>
      %25 = arith.addf %19, %24 : vector<1x2x128xf32>
      %26 = vector.extract_strided_slice %8 {offsets = [0, 3, 0, 0], sizes = [1, 1, 2, 128], strides = [1, 1, 1, 1]} : vector<1x4x2x128xf32> to vector<1x1x2x128xf32>
      %27 = vector.shape_cast %26 : vector<1x1x2x128xf32> to vector<1x2x128xf32>
      %c0_17 = arith.constant 0 : index
      %c3 = arith.constant 3 : index
      %28 = memref.load %arg3[%c0_17, %c3] : memref<3x4xf32, #tpu.memory_space<smem>>
      %29 = vector.broadcast %28 : f32 to vector<1x2x128xf32>
      %30 = arith.mulf %27, %29 : vector<1x2x128xf32>
      %31 = arith.addf %25, %30 : vector<1x2x128xf32>
      %c0_18 = arith.constant 0 : index
      %32 = memref.load %arg4[%c0_18] : memref<3xf32, #tpu.memory_space<smem>>
      %33 = vector.broadcast %32 : f32 to vector<1x2x128xf32>
      %34 = arith.addf %31, %33 : vector<1x2x128xf32>
      %35 = vector.extract_strided_slice %8 {offsets = [0, 0, 0, 0], sizes = [1, 1, 2, 128], strides = [1, 1, 1, 1]} : vector<1x4x2x128xf32> to vector<1x1x2x128xf32>
      %36 = vector.shape_cast %35 : vector<1x1x2x128xf32> to vector<1x2x128xf32>
      %c1_19 = arith.constant 1 : index
      %c0_20 = arith.constant 0 : index
      %37 = memref.load %arg3[%c1_19, %c0_20] : memref<3x4xf32, #tpu.memory_space<smem>>
      %38 = vector.broadcast %37 : f32 to vector<1x2x128xf32>
      %39 = arith.mulf %36, %38 : vector<1x2x128xf32>
      %40 = vector.extract_strided_slice %8 {offsets = [0, 1, 0, 0], sizes = [1, 1, 2, 128], strides = [1, 1, 1, 1]} : vector<1x4x2x128xf32> to vector<1x1x2x128xf32>
      %41 = vector.shape_cast %40 : vector<1x1x2x128xf32> to vector<1x2x128xf32>
      %c1_21 = arith.constant 1 : index
      %c1_22 = arith.constant 1 : index
      %42 = memref.load %arg3[%c1_21, %c1_22] : memref<3x4xf32, #tpu.memory_space<smem>>
      %43 = vector.broadcast %42 : f32 to vector<1x2x128xf32>
      %44 = arith.mulf %41, %43 : vector<1x2x128xf32>
      %45 = arith.addf %39, %44 : vector<1x2x128xf32>
      %46 = vector.extract_strided_slice %8 {offsets = [0, 2, 0, 0], sizes = [1, 1, 2, 128], strides = [1, 1, 1, 1]} : vector<1x4x2x128xf32> to vector<1x1x2x128xf32>
      %47 = vector.shape_cast %46 : vector<1x1x2x128xf32> to vector<1x2x128xf32>
      %c1_23 = arith.constant 1 : index
      %c2_24 = arith.constant 2 : index
      %48 = memref.load %arg3[%c1_23, %c2_24] : memref<3x4xf32, #tpu.memory_space<smem>>
      %49 = vector.broadcast %48 : f32 to vector<1x2x128xf32>
      %50 = arith.mulf %47, %49 : vector<1x2x128xf32>
      %51 = arith.addf %45, %50 : vector<1x2x128xf32>
      %52 = vector.extract_strided_slice %8 {offsets = [0, 3, 0, 0], sizes = [1, 1, 2, 128], strides = [1, 1, 1, 1]} : vector<1x4x2x128xf32> to vector<1x1x2x128xf32>
      %53 = vector.shape_cast %52 : vector<1x1x2x128xf32> to vector<1x2x128xf32>
      %c1_25 = arith.constant 1 : index
      %c3_26 = arith.constant 3 : index
      %54 = memref.load %arg3[%c1_25, %c3_26] : memref<3x4xf32, #tpu.memory_space<smem>>
      %55 = vector.broadcast %54 : f32 to vector<1x2x128xf32>
      %56 = arith.mulf %53, %55 : vector<1x2x128xf32>
      %57 = arith.addf %51, %56 : vector<1x2x128xf32>
      %c1_27 = arith.constant 1 : index
      %58 = memref.load %arg4[%c1_27] : memref<3xf32, #tpu.memory_space<smem>>
      %59 = vector.broadcast %58 : f32 to vector<1x2x128xf32>
      %60 = arith.addf %57, %59 : vector<1x2x128xf32>
      %61 = vector.extract_strided_slice %8 {offsets = [0, 0, 0, 0], sizes = [1, 1, 2, 128], strides = [1, 1, 1, 1]} : vector<1x4x2x128xf32> to vector<1x1x2x128xf32>
      %62 = vector.shape_cast %61 : vector<1x1x2x128xf32> to vector<1x2x128xf32>
      %c2_28 = arith.constant 2 : index
      %c0_29 = arith.constant 0 : index
      %63 = memref.load %arg3[%c2_28, %c0_29] : memref<3x4xf32, #tpu.memory_space<smem>>
      %64 = vector.broadcast %63 : f32 to vector<1x2x128xf32>
      %65 = arith.mulf %62, %64 : vector<1x2x128xf32>
      %66 = vector.extract_strided_slice %8 {offsets = [0, 1, 0, 0], sizes = [1, 1, 2, 128], strides = [1, 1, 1, 1]} : vector<1x4x2x128xf32> to vector<1x1x2x128xf32>
      %67 = vector.shape_cast %66 : vector<1x1x2x128xf32> to vector<1x2x128xf32>
      %c2_30 = arith.constant 2 : index
      %c1_31 = arith.constant 1 : index
      %68 = memref.load %arg3[%c2_30, %c1_31] : memref<3x4xf32, #tpu.memory_space<smem>>
      %69 = vector.broadcast %68 : f32 to vector<1x2x128xf32>
      %70 = arith.mulf %67, %69 : vector<1x2x128xf32>
      %71 = arith.addf %65, %70 : vector<1x2x128xf32>
      %72 = vector.extract_strided_slice %8 {offsets = [0, 2, 0, 0], sizes = [1, 1, 2, 128], strides = [1, 1, 1, 1]} : vector<1x4x2x128xf32> to vector<1x1x2x128xf32>
      %73 = vector.shape_cast %72 : vector<1x1x2x128xf32> to vector<1x2x128xf32>
      %c2_32 = arith.constant 2 : index
      %c2_33 = arith.constant 2 : index
      %74 = memref.load %arg3[%c2_32, %c2_33] : memref<3x4xf32, #tpu.memory_space<smem>>
      %75 = vector.broadcast %74 : f32 to vector<1x2x128xf32>
      %76 = arith.mulf %73, %75 : vector<1x2x128xf32>
      %77 = arith.addf %71, %76 : vector<1x2x128xf32>
      %78 = vector.extract_strided_slice %8 {offsets = [0, 3, 0, 0], sizes = [1, 1, 2, 128], strides = [1, 1, 1, 1]} : vector<1x4x2x128xf32> to vector<1x1x2x128xf32>
      %79 = vector.shape_cast %78 : vector<1x1x2x128xf32> to vector<1x2x128xf32>
      %c2_34 = arith.constant 2 : index
      %c3_35 = arith.constant 3 : index
      %80 = memref.load %arg3[%c2_34, %c3_35] : memref<3x4xf32, #tpu.memory_space<smem>>
      %81 = vector.broadcast %80 : f32 to vector<1x2x128xf32>
      %82 = arith.mulf %79, %81 : vector<1x2x128xf32>
      %83 = arith.addf %77, %82 : vector<1x2x128xf32>
      %c2_36 = arith.constant 2 : index
      %84 = memref.load %arg4[%c2_36] : memref<3xf32, #tpu.memory_space<smem>>
      %85 = vector.broadcast %84 : f32 to vector<1x2x128xf32>
      %86 = arith.addf %83, %85 : vector<1x2x128xf32>
      %87 = arith.maximumf %34, %60 : vector<1x2x128xf32>
      %88 = arith.maximumf %87, %86 : vector<1x2x128xf32>
      %89 = arith.subf %34, %88 : vector<1x2x128xf32>
      %90 = math.exp %89 : vector<1x2x128xf32>
      %91 = arith.subf %60, %88 : vector<1x2x128xf32>
      %92 = math.exp %91 : vector<1x2x128xf32>
      %93 = arith.subf %86, %88 : vector<1x2x128xf32>
      %94 = math.exp %93 : vector<1x2x128xf32>
      %95 = arith.addf %90, %92 : vector<1x2x128xf32>
      %96 = arith.addf %95, %94 : vector<1x2x128xf32>
      %97 = tpu.reciprocal %96 {approx = true} : vector<1x2x128xf32> -> vector<1x2x128xf32>
      %98 = arith.mulf %96, %97 : vector<1x2x128xf32>
      %cst = arith.constant 2.000000e+00 : f32
      %99 = vector.broadcast %cst : f32 to vector<1x2x128xf32>
      %100 = arith.subf %99, %98 : vector<1x2x128xf32>
      %101 = arith.mulf %97, %100 : vector<1x2x128xf32>
      %102 = arith.mulf %90, %101 : vector<1x2x128xf32>
      %103 = arith.truncf %102 : vector<1x2x128xf32> to vector<1x2x128xbf16>
      %c0_37 = arith.constant 0 : index
      %c0_38 = arith.constant 0 : index
      %c0_39 = arith.constant 0 : index
      %c0_40 = arith.constant 0 : index
      %104 = vector.load %arg7[%c0_37, %c0_38, %c0_39, %c0_40] : memref<1x3x2x128xbf16, #tpu.memory_space<vmem>>, vector<1x1x2x128xbf16>
      %105 = vector.shape_cast %104 : vector<1x1x2x128xbf16> to vector<1x2x128xbf16>
      %106 = vector.shape_cast %103 : vector<1x2x128xbf16> to vector<1x1x2x128xbf16>
      tpu.vector_store %arg7[%c0_37, %c0_38, %c0_39, %c0_40], %106 {strides = array<i32>} : memref<1x3x2x128xbf16, #tpu.memory_space<vmem>>, vector<1x1x2x128xbf16>,
      %107 = arith.mulf %92, %101 : vector<1x2x128xf32>
      %108 = arith.truncf %107 : vector<1x2x128xf32> to vector<1x2x128xbf16>
      %c0_41 = arith.constant 0 : index
      %c1_42 = arith.constant 1 : index
      %c0_43 = arith.constant 0 : index
      %c0_44 = arith.constant 0 : index
      %109 = vector.load %arg7[%c0_41, %c1_42, %c0_43, %c0_44] : memref<1x3x2x128xbf16, #tpu.memory_space<vmem>>, vector<1x1x2x128xbf16>
      %110 = vector.shape_cast %109 : vector<1x1x2x128xbf16> to vector<1x2x128xbf16>
      %111 = vector.shape_cast %108 : vector<1x2x128xbf16> to vector<1x1x2x128xbf16>
      tpu.vector_store %arg7[%c0_41, %c1_42, %c0_43, %c0_44], %111 {strides = array<i32>} : memref<1x3x2x128xbf16, #tpu.memory_space<vmem>>, vector<1x1x2x128xbf16>,
      %112 = arith.mulf %94, %101 : vector<1x2x128xf32>
      %113 = arith.truncf %112 : vector<1x2x128xf32> to vector<1x2x128xbf16>
      %c0_45 = arith.constant 0 : index
      %c2_46 = arith.constant 2 : index
      %c0_47 = arith.constant 0 : index
      %c0_48 = arith.constant 0 : index
      %114 = vector.load %arg7[%c0_45, %c2_46, %c0_47, %c0_48] : memref<1x3x2x128xbf16, #tpu.memory_space<vmem>>, vector<1x1x2x128xbf16>
      %115 = vector.shape_cast %114 : vector<1x1x2x128xbf16> to vector<1x2x128xbf16>
      %116 = vector.shape_cast %113 : vector<1x2x128xbf16> to vector<1x1x2x128xbf16>
      tpu.vector_store %arg7[%c0_45, %c2_46, %c0_47, %c0_48], %116 {strides = array<i32>} : memref<1x3x2x128xbf16, #tpu.memory_space<vmem>>, vector<1x1x2x128xbf16>,
    } else {
    }
    %c0 = arith.constant 0 : index
    %c0_1 = arith.constant 0 : index
    %c0_2 = arith.constant 0 : index
    %c0_3 = arith.constant 0 : index
    %3 = vector.load %arg7[%c0, %c0_1, %c0_2, %c0_3] : memref<1x3x2x128xbf16, #tpu.memory_space<vmem>>, vector<1x3x2x128xbf16>
    %c0_4 = arith.constant 0 : index
    %c0_5 = arith.constant 0 : index
    %c0_6 = arith.constant 0 : index
    %c0_7 = arith.constant 0 : index
    %c0_8 = arith.constant 0 : index
    %4 = vector.load %arg6[%c0_4, %c0_5, %c0_6, %c0_7, %c0_8] : memref<1x1x3x2x128xbf16, #tpu.memory_space<vmem>>, vector<1x1x3x2x128xbf16>
    %5 = vector.shape_cast %4 : vector<1x1x3x2x128xbf16> to vector<1x3x2x128xbf16>
    %6 = vector.shape_cast %3 : vector<1x3x2x128xbf16> to vector<1x1x3x2x128xbf16>
    tpu.vector_store %arg6[%c0_4, %c0_5, %c0_6, %c0_7, %c0_8], %6 {strides = array<i32>} : memref<1x1x3x2x128xbf16, #tpu.memory_space<vmem>>, vector<1x1x3x2x128xbf16>,
    return
  }
  func.func @transform_0(%arg0: i32, %arg1: i32, %arg2: i32) -> (i32, i32) {
    %c0_i32 = arith.constant 0 : i32
    %c0_i32_0 = arith.constant 0 : i32
    %c0_i32_1 = arith.constant 0 : i32
    return %c0_i32, %c0_i32_0 : i32, i32
  }
  func.func @transform_1(%arg0: i32, %arg1: i32, %arg2: i32) -> i32 {
    %c0_i32 = arith.constant 0 : i32
    %c0_i32_0 = arith.constant 0 : i32
    return %c0_i32 : i32
  }
  func.func @transform_2(%arg0: i32, %arg1: i32, %arg2: i32) -> (i32, i32, i32, i32) {
    %c0_i32 = arith.constant 0 : i32
    %c0_i32_0 = arith.constant 0 : i32
    %c0_i32_1 = arith.constant 0 : i32
    return %arg0, %c0_i32, %arg1, %c0_i32_0 : i32, i32, i32, i32
  }
  func.func @transform_3(%arg0: i32, %arg1: i32, %arg2: i32) -> (i32, i32, i32, i32, i32) {
    %c0_i32 = arith.constant 0 : i32
    %c0_i32_0 = arith.constant 0 : i32
    %c0_i32_1 = arith.constant 0 : i32
    return %arg2, %arg0, %c0_i32, %arg1, %c0_i32_0 : i32, i32, i32, i32, i32
  }
}

</mosaic_0001>

<llo_original>
// kernel: tta_model_forward.1
$region0: #{tta_model_forward.1}
  #allocation0 [shape = 'u32[]', space=smem, size = 0x4, offset = 0x4, fixed_abs, tag = 'smem constant byte address 0x4 - core index']
  #allocation1 [shape = 'u32[144,128]{1,0:T(1,128)}', space=vmem, size = 0x12000, scoped, tag = 'internal scratch']
  #allocation2 [shape = 'bf16[1,3,2,128]{3,2,1,0:T(2,128)(2,1)}', space=vmem, size = 0x600, scoped, tag = 'scratch operand']
  %s0 = inlined_call_operand.vmem [shape: f32[3,4], index: 0, kind: input, shape index: {}]
  %s1 = inlined_call_operand.vmem [shape: f32[3], index: 1, kind: input, shape index: {}]
  %s2 = inlined_call_operand.vmem [shape: bf16[2,4,2,128], index: 2, kind: input, shape index: {}]
  %s3 = inlined_call_operand.vmem [shape: bf16[6,2,3,2,128], index: 3, kind: output, shape index: {}]
  %s4 = sld [smem:[#allocation0]]
  $region57: #{tta_model_forward.1} parent=0
    _
  %s6 = ssub.s32 1, %s4
  %s7 = scalar_select 0, %s6, %s4
  $region1: #{tta_model_forward.1} parent=0
    #allocation3 [shape = 'u8[2048]{0}', space=smem, size = 0x800, scoped, tag = 'input window, operand 0, single buffered']
    #allocation4 [shape = 's32[2]{0}', space=sflag, size = 0x8, scoped, tag = 'scoped memory for tta_model_forward.1']
    #allocation5 [shape = 'u8[512]{0}', space=smem, size = 0x200, scoped, tag = 'input window, operand 1, single buffered']
    #allocation6 [shape = 's32[1]{0}', space=sflag, size = 0x4, scoped, tag = 'scoped memory for tta_model_forward.1']
    %8 = vsyncpa [#allocation4], 0
    %9 = vsyncpa [#allocation6], 0
    loop: start=0, step=1, limit=14
    $region2: #{tta_model_forward.1} parent=1 // loop_pre_header
      _
    $region3: #{tta_model_forward.1} parent=1 // loop_header
      %s11 = sphi 0, %s15
      %p12 = scmp.ge.s32.totalorder %s11, 14
      %s18 = sphi 0, %s37
      %s19 = sphi 0, %s33
      %s20 = sphi 0, %s29
      %s21 = sphi 0, %s18
      %s22 = sphi 0, %s19
      %s23 = sphi 0, %s20
      %s24 = sphi 0, %s21
      %s25 = sphi 0, %s22
      %s26 = sphi 0, %s23
      %s38 = sphi 0, %s38
      %s40 = sphi 0, %s38
      %s41 = sphi 0, %s40
      %s55 = sphi 0, %s41
      %s59 = sphi 0, %s59
      %s61 = sphi 0, %s59
      %s62 = sphi 0, %s61
      %s76 = sphi 0, %s62
      %s84 = sphi 0, %s86
      %s87 = sphi 0, %s84
      %s88 = sphi 0, %s87
      %s104 = sphi 0, %s88
      %s114 = sphi 0, %s116
      %s117 = sphi 0, %s114
      %s118 = sphi 0, %s117
      %s134 = sphi 0, %s118
    $region4: #{tta_model_forward.1} parent=1 // loop_header_branch
      %14 = sbr.rel (%p12) target = $region8
    $region5: #{tta_model_forward.1} parent=1 // loop_body
      %s16 = ssub.s32 %s11, 1
      %s17 = ssub.s32 %s11, 2
      %s27 = sadd.s32 1, %s20
      %p28 = scmp.ge.s32.totalorder %s27, 6
      %s29 = scalar_select %p28, 0, %s27
      %s30 = sadd.s32 1, %s19
      %s31 = scalar_select %p28, %s30, %s19
      %p32 = scmp.ge.s32.totalorder %s31, 1
      %s33 = scalar_select %p32, 0, %s31
      %s34 = sadd.s32 1, %s18
      %s35 = scalar_select %p32, %s34, %s18
      %p36 = scmp.ge.s32.totalorder %s35, 2
      %s37 = scalar_select %p36, 0, %s35
      %s39 = sadd.s32 %s38, 1
      %p42 = scmp.eq.s32.totalorder %s11, 11
      %p43 = scmp.ne.s32.totalorder %s38, %s40
      %p44 = scmp.eq.s32.totalorder %s11, 0
      %p45 = por %p43, %p44
      %p46 = scmp.ne.s32.totalorder %s38, %s40
      %p47 = scmp.eq.s32.totalorder %s16, 11
      %p48 = por %p46, %p47
      %p49 = scmp.ne.s32.totalorder %s40, %s41
      %p50 = scmp.eq.s32.totalorder %s16, 0
      %p51 = por %p49, %p50
      %p52 = scmp.ne.s32.totalorder %s40, %s41
      %p53 = scmp.eq.s32.totalorder %s17, 11
      %p54 = por %p52, %p53
      %p56 = scmp.ne.s32.totalorder %s41, %s55
      %p57 = scmp.eq.s32.totalorder %s17, 0
      %p58 = por %p56, %p57
      %s60 = sadd.s32 %s59, 1
      %p63 = scmp.eq.s32.totalorder %s11, 11
      %p64 = scmp.ne.s32.totalorder %s59, %s61
      %p65 = scmp.eq.s32.totalorder %s11, 0
      %p66 = por %p64, %p65
      %p67 = scmp.ne.s32.totalorder %s59, %s61
      %p68 = scmp.eq.s32.totalorder %s16, 11
      %p69 = por %p67, %p68
      %p70 = scmp.ne.s32.totalorder %s61, %s62
      %p71 = scmp.eq.s32.totalorder %s16, 0
      %p72 = por %p70, %p71
      %p73 = scmp.ne.s32.totalorder %s61, %s62
      %p74 = scmp.eq.s32.totalorder %s17, 11
      %p75 = por %p73, %p74
      %p77 = scmp.ne.s32.totalorder %s62, %s76
      %p78 = scmp.eq.s32.totalorder %s17, 0
      %p79 = por %p77, %p78
      %s80 = ssub.s32 %s18, %s37
      %s81 = ssub.s32 %s19, %s33
      %s82 = sor.u32 %s80, %s81
      %p83 = scmp.eq.s32.totalorder %s82, 0
      %s85 = sadd.s32 %s84, 1
      %s86 = scalar_select %p83, %s84, %s85
      %p89 = pneg %p83
      %p90 = scmp.eq.s32.totalorder %s11, 11
      %p91 = por %p89, %p90
      %p92 = scmp.ne.s32.totalorder %s84, %s87
      %p93 = scmp.eq.s32.totalorder %s11, 0
      %p94 = por %p92, %p93
      %p95 = scmp.ne.s32.totalorder %s84, %s87
      %p96 = scmp.eq.s32.totalorder %s16, 11
      %p97 = por %p95, %p96
      %p98 = scmp.ne.s32.totalorder %s87, %s88
      %p99 = scmp.eq.s32.totalorder %s16, 0
      %p100 = por %p98, %p99
      %p101 = scmp.ne.s32.totalorder %s87, %s88
      %p102 = scmp.eq.s32.totalorder %s17, 11
      %p103 = por %p101, %p102
      %p105 = scmp.ne.s32.totalorder %s88, %s104
      %p106 = scmp.eq.s32.totalorder %s17, 0
      %p107 = por %p105, %p106
      %s108 = ssub.s32 %s20, %s29
      %s109 = ssub.s32 %s18, %s37
      %s110 = sor.u32 %s108, %s109
      %s111 = ssub.s32 %s19, %s33
      %s112 = sor.u32 %s110, %s111
      %p113 = scmp.eq.s32.totalorder %s112, 0
      %s115 = sadd.s32 %s114, 1
      %s116 = scalar_select %p113, %s114, %s115
      %p119 = pneg %p113
      %p120 = scmp.eq.s32.totalorder %s11, 11
      %p121 = por %p119, %p120
      %p122 = scmp.ne.s32.totalorder %s114, %s117
      %p123 = scmp.eq.s32.totalorder %s11, 0
      %p124 = por %p122, %p123
      %p125 = scmp.ne.s32.totalorder %s114, %s117
      %p126 = scmp.eq.s32.totalorder %s16, 11
      %p127 = por %p125, %p126
      %p128 = scmp.ne.s32.totalorder %s117, %s118
      %p129 = scmp.eq.s32.totalorder %s16, 0
      %p130 = por %p128, %p129
      %p131 = scmp.ne.s32.totalorder %s117, %s118
      %p132 = scmp.eq.s32.totalorder %s17, 11
      %p133 = por %p131, %p132
      %p135 = scmp.ne.s32.totalorder %s118, %s134
      %p136 = scmp.eq.s32.totalorder %s17, 0
      %p137 = por %p135, %p136
      %p138 = scmp.le.s32.totalorder 1, %s11
      %p139 = scmp.lt.s32.totalorder %s11, 13
      %p140 = pnand %p138, %p139
      %p141 = pneg %p140
      // Predicated region
      $region9: #{tta_model_forward.1} parent=5 // pred_check
        _
      $region10: #{tta_model_forward.1} parent=5 // pred_check_branch
        %143 = sbr.rel (%p140) target = $region12
      $region11: #{tta_model_forward.1} parent=5 // pred_region
        %s144 = ssub.s32 %s11, 1
        // Predicated region
        $region13: #{tta_model_forward.1} parent=11 // pred_check
          %p145 = pneg %p51
        $region14: #{tta_model_forward.1} parent=11 // pred_check_branch
          %147 = sbr.rel (%p145) target = $region16
        $region15: #{tta_model_forward.1} parent=11 // pred_region
          %s149 = ssub.s32 64, 64
          %150 = vsyncadd [#allocation4], %s149
          %s152 = sshll.u32 %s0, 4
          %s153 = int_to_ptr.vmem [resolvable:$true] %s152
          %155 = dma.vmem_to_smem %s153, 64, [#allocation3], [#allocation4]
        $region16: #{tta_model_forward.1} parent=11 // pred_fallthru
          _
        // Predicated region
        $region17: #{tta_model_forward.1} parent=11 // pred_check
          %p156 = pneg %p72
        $region18: #{tta_model_forward.1} parent=11 // pred_check_branch
          %158 = sbr.rel (%p156) target = $region20
        $region19: #{tta_model_forward.1} parent=11 // pred_region
          %s160 = ssub.s32 16, 16
          %161 = vsyncadd [#allocation6], %s160
          %s163 = sshll.u32 %s1, 4
          %s164 = int_to_ptr.vmem [resolvable:$true] %s163
          %166 = dma.vmem_to_smem %s164, 16, [#allocation5], [#allocation6]
        $region20: #{tta_model_forward.1} parent=11 // pred_fallthru
          _
      $region12: #{tta_model_forward.1} parent=5 // pred_fallthru
        _
      %p167 = scmp.lt.s32.totalorder %s11, 12
      // Predicated region
      $region21: #{tta_model_forward.1} parent=5 // pred_check
        %p168 = pneg %p167
      $region22: #{tta_model_forward.1} parent=5 // pred_check_branch
        %170 = sbr.rel (%p168) target = $region24
      $region23: #{tta_model_forward.1} parent=5 // pred_region
        // Predicated region
        $region25: #{tta_model_forward.1} parent=23 // pred_check
          %p171 = pneg %p94
        $region26: #{tta_model_forward.1} parent=23 // pred_check_branch
          %173 = sbr.rel (%p171) target = $region28
        $region27: #{tta_model_forward.1} parent=23 // pred_region
          %p174 = scmp.lt.s32.totalorder %s18, 1
          %s175 = scalar_select %p174, %s18, 1
          %p176 = scmp.lt.s32.totalorder %s19, 0
          %s177 = scalar_select %p176, %s19, 0
          %s178 = smul.addr %s175, 4
          %s179 = sadd.s32 %s177, %s178
          %s180 = scalar_lea.vmem %s2, %s179
        $region28: #{tta_model_forward.1} parent=23 // pred_fallthru
          _
      $region24: #{tta_model_forward.1} parent=5 // pred_fallthru
        _
      %p181 = scmp.le.s32.totalorder 1, %s11
      %p182 = scmp.lt.s32.totalorder %s11, 13
      %p183 = pnand %p181, %p182
      %p184 = pneg %p183
      // Predicated region
      $region29: #{tta_model_forward.1} parent=5 // pred_check
        _
      $region30: #{tta_model_forward.1} parent=5 // pred_check_branch
        %186 = sbr.rel (%p183) target = $region32
      $region31: #{tta_model_forward.1} parent=5 // pred_region
        %s187 = ssub.s32 %s11, 1
        // Predicated region
        $region33: #{tta_model_forward.1} parent=31 // pred_check
          %p188 = pneg %p51
        $region34: #{tta_model_forward.1} parent=31 // pred_check_branch
          %190 = sbr.rel (%p188) target = $region36
        $region35: #{tta_model_forward.1} parent=31 // pred_region
          %191 = dma.done [#allocation4], 64
        $region36: #{tta_model_forward.1} parent=31 // pred_fallthru
          _
        // Predicated region
        $region37: #{tta_model_forward.1} parent=31 // pred_check
          %p192 = pneg %p72
        $region38: #{tta_model_forward.1} parent=31 // pred_check_branch
          %194 = sbr.rel (%p192) target = $region40
        $region39: #{tta_model_forward.1} parent=31 // pred_region
          %195 = dma.done [#allocation6], 16
        $region40: #{tta_model_forward.1} parent=31 // pred_fallthru
          _
        %196 = sfence
        %p197 = pneg %p51
        %p198 = pneg %p48
        %p199 = pneg %p72
        %p200 = pneg %p69
        %p201 = scmp.lt.s32.totalorder %s21, 1
        %s202 = scalar_select %p201, %s21, 1
        %p203 = scmp.lt.s32.totalorder %s22, 0
        %s204 = scalar_select %p203, %s22, 0
        %s205 = smul.addr %s202, 4
        %s206 = sadd.s32 %s204, %s205
        %s207 = scalar_lea.vmem %s2, %s206
        %p208 = pneg %p100
        %p209 = pneg %p97
        %p210 = pneg %p130
        %p211 = pneg %p127
        %p212 = scmp.lt.s32.totalorder %s23, 5
        %s213 = scalar_select %p212, %s23, 5
        %p214 = scmp.lt.s32.totalorder %s21, 1
        %s215 = scalar_select %p214, %s21, 1
        %p216 = scmp.lt.s32.totalorder %s22, 0
        %s217 = scalar_select %p216, %s22, 0
        %s218 = smul.addr %s215, 3
        %s219 = sadd.s32 %s217, %s218
        %s220 = smul.addr %s213, 6
        %s221 = sadd.s32 %s219, %s220
        %s222 = scalar_lea.vmem %s3, %s221
        %p223 = scmp.lt.s32.totalorder %s21, 1
        %s224 = scalar_select %p223, %s21, 1
        %p225 = scmp.lt.s32.totalorder %s22, 0
        %s226 = scalar_select %p225, %s22, 0
        %s227 = smul.addr %s224, 4
        %s228 = sadd.s32 %s226, %s227
        %s229 = scalar_lea.vmem %s2, %s228
        %p230 = scmp.lt.s32.totalorder %s23, 5
        %s231 = scalar_select %p230, %s23, 5
        %p232 = scmp.lt.s32.totalorder %s21, 1
        %s233 = scalar_select %p232, %s21, 1
        %p234 = scmp.lt.s32.totalorder %s22, 0
        %s235 = scalar_select %p234, %s22, 0
        %s236 = smul.addr %s233, 3
        %s237 = sadd.s32 %s235, %s236
        %s238 = smul.addr %s231, 6
        %s239 = sadd.s32 %s237, %s238
        %s240 = scalar_lea.vmem %s3, %s239
        %p241 = scmp.eq.s32.totalorder %s23, 0
        // Predicated region
        $region41: #{tta_model_forward.1} parent=31 // pred_check
          %p242 = pneg %p241
        $region42: #{tta_model_forward.1} parent=31 // pred_check_branch
          %244 = sbr.rel (%p242) target = $region44
        $region43: #{tta_model_forward.1} parent=31 // pred_region
          %v245 = vld [vmem:[%s229] sm:$0x1]
          %v246 = vld [vmem:[%s229 + $0x1] sm:$0x1]
          %v247 = vld [vmem:[%s229 + $0x2] sm:$0x1]
          %v248 = vld [vmem:[%s229 + $0x3] sm:$0x1]
          %v249 = vunpack.c.l.bf16 %v245
          %v250 = vunpack.c.l.bf16 %v246
          %v251 = vunpack.c.l.bf16 %v247
          %v252 = vunpack.c.l.bf16 %v248
          %s253 = sld [smem:[#allocation3]]
          %v254 = vstv %s253
          %v255 = vmul.f32 %v249, %v254
          %s256 = sld [smem:[#allocation3 + $0x1]]
          %v257 = vstv %s256
          %v258 = vmul.f32 %v250, %v257
          %v259 = vadd.f32 %v255, %v258
          %s260 = sld [smem:[#allocation3 + $0x2]]
          %v261 = vstv %s260
          %v262 = vmul.f32 %v251, %v261
          %v263 = vadd.f32 %v259, %v262
          %s264 = sld [smem:[#allocation3 + $0x3]]
          %v265 = vstv %s264
          %v266 = vmul.f32 %v252, %v265
          %v267 = vadd.f32 %v263, %v266
          %s268 = sld [smem:[#allocation5]]
          %v269 = vstv %s268
          %v270 = vadd.f32 %v267, %v269
          %s271 = sld [smem:[#allocation3 + $0x80]]
          %v272 = vstv %s271
          %v273 = vmul.f32 %v249, %v272
          %s274 = sld [smem:[#allocation3 + $0x81]]
          %v275 = vstv %s274
          %v276 = vmul.f32 %v250, %v275
          %v277 = vadd.f32 %v273, %v276
          %s278 = sld [smem:[#allocation3 + $0x82]]
          %v279 = vstv %s278
          %v280 = vmul.f32 %v251, %v279
          %v281 = vadd.f32 %v277, %v280
          %s282 = sld [smem:[#allocation3 + $0x83]]
          %v283 = vstv %s282
          %v284 = vmul.f32 %v252, %v283
          %v285 = vadd.f32 %v281, %v284
          %s286 = sld [smem:[#allocation5 + $0x1]]
          %v287 = vstv %s286
          %v288 = vadd.f32 %v285, %v287
          %s289 = sld [smem:[#allocation3 + $0x100]]
          %v290 = vstv %s289
          %v291 = vmul.f32 %v249, %v290
          %s292 = sld [smem:[#allocation3 + $0x101]]
          %v293 = vstv %s292
          %v294 = vmul.f32 %v250, %v293
          %v295 = vadd.f32 %v291, %v294
          %s296 = sld [smem:[#allocation3 + $0x102]]
          %v297 = vstv %s296
          %v298 = vmul.f32 %v251, %v297
          %v299 = vadd.f32 %v295, %v298
          %s300 = sld [smem:[#allocation3 + $0x103]]
          %v301 = vstv %s300
          %v302 = vmul.f32 %v252, %v301
          %v303 = vadd.f32 %v299, %v302
          %s304 = sld [smem:[#allocation5 + $0x2]]
          %v305 = vstv %s304
          %v306 = vadd.f32 %v303, %v305
          %v307 = vmax.f32 %v270, %v288
          %v308 = vmax.f32 %v307, %v306
          %v309 = vsub.f32 %v270, %v308
          %v310 = vmul.f32 %v309, 1.442695
          %v311 = vpow.pop %v310
          %v312 = vsub.f32 %v288, %v308
          %v313 = vmul.f32 %v312, 1.442695
          %v314 = vpow.pop %v313
          %v315 = vsub.f32 %v306, %v308
          %v316 = vmul.f32 %v315, 1.442695
          %v317 = vpow.pop %v316
          %v318 = vadd.f32 %v311, %v314
          %v319 = vadd.f32 %v318, %v317
          %v320 = vrcp.pop %v319
          %v321 = vmul.f32 %v319, %v320
          %v322 = vsub.f32 2.0, %v321
          %v323 = vmul.f32 %v320, %v322
          %v324 = vmul.f32 %v311, %v323
          %v325 = vpack.c.bf16 %v324, %v324
          %326 = vst [vmem:[#allocation2] sm:$0x1] %v325
          %v327 = vmul.f32 %v314, %v323
          %v328 = vpack.c.bf16 %v327, %v327
          %s329 = scalar_lea.vmem [#allocation2], 1
          %330 = vst [vmem:[%s329] sm:$0x1] %v328
          %v331 = vmul.f32 %v317, %v323
          %v332 = vpack.c.bf16 %v331, %v331
          %s333 = scalar_lea.vmem [#allocation2], 2
          %334 = vst [vmem:[%s333] sm:$0x1] %v332
        $region44: #{tta_model_forward.1} parent=31 // pred_fallthru
          _
        %v335 = vld [vmem:[#allocation2] sm:$0x1]
        %v336 = vld [vmem:[#allocation2 + $0x1] sm:$0x1]
        %v337 = vld [vmem:[#allocation2 + $0x2] sm:$0x1]
        %338 = vst [vmem:[%s240] sm:$0x1] %v335
        %339 = vst [vmem:[%s240 + $0x1] sm:$0x1] %v336
        %340 = vst [vmem:[%s240 + $0x2] sm:$0x1] %v337
        %p341 = scmp.lt.s32.totalorder %s23, 5
        %s342 = scalar_select %p341, %s23, 5
        %p343 = scmp.lt.s32.totalorder %s21, 1
        %s344 = scalar_select %p343, %s21, 1
        %p345 = scmp.lt.s32.totalorder %s22, 0
        %s346 = scalar_select %p345, %s22, 0
        %s347 = smul.addr %s344, 3
        %s348 = sadd.s32 %s346, %s347
        %s349 = smul.addr %s342, 6
        %s350 = sadd.s32 %s348, %s349
        %s351 = scalar_lea.vmem %s3, %s350
        // Predicated region
        $region45: #{tta_model_forward.1} parent=31 // pred_check
          %p352 = pneg %p127
        $region46: #{tta_model_forward.1} parent=31 // pred_check_branch
          %354 = sbr.rel (%p352) target = $region48
        $region47: #{tta_model_forward.1} parent=31 // pred_region
          _
        $region48: #{tta_model_forward.1} parent=31 // pred_fallthru
          _
      $region32: #{tta_model_forward.1} parent=5 // pred_fallthru
        _
      %p355 = scmp.le.s32.totalorder 2, %s11
      // Predicated region
      $region49: #{tta_model_forward.1} parent=5 // pred_check
        %p356 = pneg %p355
      $region50: #{tta_model_forward.1} parent=5 // pred_check_branch
        %358 = sbr.rel (%p356) target = $region52
      $region51: #{tta_model_forward.1} parent=5 // pred_region
        %s359 = ssub.s32 %s11, 2
        // Predicated region
        $region53: #{tta_model_forward.1} parent=51 // pred_check
          %p360 = pneg %p133
        $region54: #{tta_model_forward.1} parent=51 // pred_check_branch
          %362 = sbr.rel (%p360) target = $region56
        $region55: #{tta_model_forward.1} parent=51 // pred_region
          %p363 = scmp.lt.s32.totalorder %s26, 5
          %s364 = scalar_select %p363, %s26, 5
          %p365 = scmp.lt.s32.totalorder %s24, 1
          %s366 = scalar_select %p365, %s24, 1
          %p367 = scmp.lt.s32.totalorder %s25, 0
          %s368 = scalar_select %p367, %s25, 0
          %s369 = smul.addr %s366, 3
          %s370 = sadd.s32 %s368, %s369
          %s371 = smul.addr %s364, 6
          %s372 = sadd.s32 %s370, %s371
          %s373 = scalar_lea.vmem %s3, %s372
        $region56: #{tta_model_forward.1} parent=51 // pred_fallthru
          _
      $region52: #{tta_model_forward.1} parent=5 // pred_fallthru
        _
    $region6: #{tta_model_forward.1} parent=1 // loop_footer
      %s15 = sadd.s32 1, %s11
    $region7: #{tta_model_forward.1} parent=1 // loop_footer_branch
      %10 = sbr.rel target = $region3
    $region8: #{tta_model_forward.1} parent=1 // loop_exit
      _
    %374 = vsyncpa [#allocation4], 1
    %s375 = scalar_lea.sflag [#allocation4], 1
    %376 = vsyncpa %s375, 1
    %377 = vsyncpa [#allocation6], 1

</llo_original>
